<compile_context>
chip_gen: v7x
topology: tpu7x:2x2x1
jax: 0.10.0
libtpu: 0.0.40
codegen_flags: <defaults>
</compile_context>

<pallas_src>
import functools

import jax
import jax.numpy as jnp
from jax.experimental import pallas as pl
from jax.experimental.pallas import tpu as pltpu


def _policy_mean_kernel(x_ref, w_ref, b_ref, mean_ref, *,
                        ni, nh1, nh2, no, ni_pad):
    """Computes action_mean = tanh(tanh(tanh(x@W1+b1)@W2+b2)@W3+b3) * 2 for one
    batch tile.  w_ref / b_ref are packed parameter slabs resident in VMEM."""
    x = x_ref[...]

    # Static slices of the packed slabs (compile-time offsets).
    w1 = w_ref[0:ni, 0:nh1]
    w2 = w_ref[ni_pad:ni_pad + nh1, 0:nh2]
    w3 = w_ref[ni_pad + nh1:ni_pad + nh1 + nh2, 0:no]

    # Hoisted bias loads (each read exactly once).
    b1 = b_ref[0:1, 0:nh1]
    b2 = b_ref[1:2, 0:nh2]
    b3 = b_ref[2:3, 0:no]

    h1 = jnp.tanh(jnp.dot(x, w1, preferred_element_type=jnp.float32) + b1)
    h2 = jnp.tanh(jnp.dot(h1, w2, preferred_element_type=jnp.float32) + b2)
    mean_ref[...] = (
        jnp.tanh(jnp.dot(h2, w3, preferred_element_type=jnp.float32) + b3) * 2.0
    )


def _pack_params(w1, b1, w2, b2, w3, b3):
    """Pack weights into one (rows, 128) slab and biases into one (8, 128) slab."""
    ni, nh1 = w1.shape
    nh2 = w2.shape[1]
    no = w3.shape[1]
    ni_pad = ((ni + 7) // 8) * 8
    lane = max(128, ((max(nh1, nh2, no) + 127) // 128) * 128)

    wslab = jnp.zeros((ni_pad + nh1 + nh2, lane), jnp.float32)
    wslab = wslab.at[0:ni, 0:nh1].set(w1)
    wslab = wslab.at[ni_pad:ni_pad + nh1, 0:nh2].set(w2)
    wslab = wslab.at[ni_pad + nh1:ni_pad + nh1 + nh2, 0:no].set(w3)

    bslab = jnp.zeros((8, lane), jnp.float32)
    bslab = bslab.at[0, 0:nh1].set(b1[0])
    bslab = bslab.at[1, 0:nh2].set(b2[0])
    bslab = bslab.at[2, 0:no].set(b3[0])
    return wslab, bslab, ni_pad


def policy_forward(x, params, tb_max=512):
    """Policy forward pass.  Kernel emits action_mean only; log_std / std are
    computed in the wrapper from the (1, num_outputs) parameter."""
    w1, b1, w2, b2, w3, b3, log_std = params
    batch, ni = x.shape
    nh1, nh2 = w1.shape[1], w2.shape[1]
    no = w3.shape[1]

    wslab, bslab, ni_pad = _pack_params(w1, b1, w2, b2, w3, b3)

    # Batch tiling: single tile for small batches, 512-row tiles (padded) for
    # large rollout / line-search batches.  Working set per tile << 1 MiB, so
    # this fits comfortably on v5e/v6e/v7x VMEM.
    tb = batch if batch <= tb_max else tb_max
    pad = (-batch) % tb
    x_p = jnp.pad(x, ((0, pad), (0, 0))) if pad else x
    bp = batch + pad
    grid = (pl.cdiv(batch, tb),)

    kernel = functools.partial(
        _policy_mean_kernel, ni=ni, nh1=nh1, nh2=nh2, no=no, ni_pad=ni_pad)

    mean = pl.pallas_call(
        kernel,
        out_shape=jax.ShapeDtypeStruct((bp, no), jnp.float32),
        grid_spec=pltpu.PrefetchScalarGridSpec(
            num_scalar_prefetch=0,
            grid=grid,
            in_specs=[
                pl.BlockSpec((tb, ni), lambda i: (i, 0)),        # x tile
                pl.BlockSpec(wslab.shape, lambda i: (0, 0)),     # resident weights
                pl.BlockSpec(bslab.shape, lambda i: (0, 0)),     # resident biases
            ],
            out_specs=pl.BlockSpec((tb, no), lambda i: (i, 0)),
        ),
        compiler_params=pltpu.CompilerParams(
            dimension_semantics=("parallel",)),
    )(x_p, wslab, bslab)

    if pad:
        mean = mean[:batch]

    # Cheap wrapper-side ops (no DMA writebacks from the kernel for these).
    action_log_std = jnp.broadcast_to(log_std, mean.shape)
    action_std = jnp.exp(action_log_std)
    return mean, action_log_std, action_std


def init_params(key, num_inputs, num_outputs):
    """Deterministic synthetic init mirroring the module's __init__ shapes.
    Weights stored as (in, out) = torch_weight.T ."""
    k1, k2, k3, k4, k5 = jax.random.split(key, 5)
    scale = 0.1
    w1 = scale * jax.random.normal(k1, (num_inputs, 32), jnp.float32)
    b1 = scale * jax.random.normal(k2, (1, 32), jnp.float32)
    w2 = scale * jax.random.normal(k3, (32, 16), jnp.float32)
    b2 = scale * jax.random.normal(k4, (1, 16), jnp.float32)
    # action_mean: weight *= 0.1, bias *= 0.0 (as in the PyTorch __init__)
    w3 = 0.1 * (scale * jax.random.normal(k5, (16, num_outputs), jnp.float32))
    b3 = jnp.zeros((1, num_outputs), jnp.float32)
    # action_log_std = zeros(1, num_outputs)
    log_std = jnp.zeros((1, num_outputs), jnp.float32)
    return (w1, b1, w2, b2, w3, b3, log_std)


def policy_forward_ref(x, params):
    """Pure-JAX reference for correctness checking."""
    w1, b1, w2, b2, w3, b3, log_std = params
    h1 = jnp.tanh(x @ w1 + b1)
    h2 = jnp.tanh(h1 @ w2 + b2)
    mean = jnp.tanh(h2 @ w3 + b3) * 2.0
    logstd = jnp.broadcast_to(log_std, mean.shape)
    return mean, logstd, jnp.exp(logstd)


if __name__ == "__main__":
    num_inputs = 16
    num_outputs = 4

    key = jax.random.PRNGKey(0)
    kx, kp, kx2 = jax.random.split(key, 3)
    params = init_params(kp, num_inputs, num_outputs)

    # Small per-step batch (single tile path).
    x_small = jax.random.normal(kx, (8, num_inputs), jnp.float32)
    mean, logstd, std = policy_forward(x_small, params)
    jax.block_until_ready((mean, logstd, std))
    mean_r, logstd_r, std_r = policy_forward_ref(x_small, params)
    assert jnp.allclose(mean, mean_r, atol=1e-5, rtol=1e-5)
    assert jnp.allclose(logstd, logstd_r, atol=1e-6)
    assert jnp.allclose(std, std_r, atol=1e-6)

    # Large rollout batch (exercises the batch grid + padding path).
    x_big = jax.random.normal(kx2, (1000, num_inputs), jnp.float32)
    mean_b, logstd_b, std_b = policy_forward(x_big, params)
    jax.block_until_ready((mean_b, logstd_b, std_b))
    mean_br, logstd_br, std_br = policy_forward_ref(x_big, params)
    assert jnp.allclose(mean_b, mean_br, atol=1e-5, rtol=1e-5)
    assert jnp.allclose(logstd_b, logstd_br, atol=1e-6)
    assert jnp.allclose(std_b, std_br, atol=1e-6)

    print("KERNEL_OK")
</pallas_src>

<mosaic_0001>
module attributes {stable_mosaic.version = 11 : i64} {
  func.func @_policy_mean_kernel(%arg0: i32, %arg1: memref<8x16xf32, #tpu.memory_space<vmem>>, %arg2: memref<64x128xf32, #tpu.memory_space<vmem>>, %arg3: memref<8x128xf32, #tpu.memory_space<vmem>>, %arg4: memref<8x4xf32, #tpu.memory_space<vmem>>) attributes {dimension_semantics = [#tpu.dimension_semantics<parallel>], iteration_bounds = array<i64: 1>, scalar_prefetch = 0 : i64, scratch_operands = 0 : i64, tpu.core_type = #tpu.core_type<tc>, window_params = [{transform_indices = @transform_0, window_bounds = array<i64: 8, 16>}, {pipeline_mode = #tpu.pipeline_mode<synchronous>, transform_indices = @transform_1, window_bounds = array<i64: 64, 128>}, {pipeline_mode = #tpu.pipeline_mode<synchronous>, transform_indices = @transform_2, window_bounds = array<i64: 8, 128>}, {transform_indices = @transform_3, window_bounds = array<i64: 8, 4>}]} {
    %c0 = arith.constant 0 : index
    %c0_0 = arith.constant 0 : index
    %0 = vector.load %arg1[%c0, %c0_0] : memref<8x16xf32, #tpu.memory_space<vmem>>, vector<8x16xf32>
    %c0_1 = arith.constant 0 : index
    %c0_2 = arith.constant 0 : index
    %1 = vector.load %arg2[%c0_1, %c0_2] : memref<64x128xf32, #tpu.memory_space<vmem>>, vector<16x32xf32>
    %c16 = arith.constant 16 : index
    %c0_3 = arith.constant 0 : index
    %2 = vector.load %arg2[%c16, %c0_3] : memref<64x128xf32, #tpu.memory_space<vmem>>, vector<32x16xf32>
    %c48 = arith.constant 48 : index
    %c0_4 = arith.constant 0 : index
    %3 = vector.load %arg2[%c48, %c0_4] : memref<64x128xf32, #tpu.memory_space<vmem>>, vector<16x4xf32>
    %c0_5 = arith.constant 0 : index
    %c0_6 = arith.constant 0 : index
    %4 = vector.load %arg3[%c0_5, %c0_6] : memref<8x128xf32, #tpu.memory_space<vmem>>, vector<1x32xf32>
    %c1 = arith.constant 1 : index
    %c0_7 = arith.constant 0 : index
    %5 = vector.load %arg3[%c1, %c0_7] : memref<8x128xf32, #tpu.memory_space<vmem>>, vector<1x16xf32>
    %c2 = arith.constant 2 : index
    %c0_8 = arith.constant 0 : index
    %6 = vector.load %arg3[%c2, %c0_8] : memref<8x128xf32, #tpu.memory_space<vmem>>, vector<1x4xf32>
    %cst = arith.constant dense<0.000000e+00> : vector<8x32xf32>
    %7 = tpu.matmul %0, %1, %cst {dimension_numbers = #tpu.dot_dimension_numbers<[1], [0], [0], [1], [0, 0, 1, 1], [], []>} : vector<8x16xf32>, vector<16x32xf32>, vector<8x32xf32> -> vector<8x32xf32>
    %8 = vector.broadcast %4 : vector<1x32xf32> to vector<8x32xf32>
    %9 = arith.addf %7, %8 : vector<8x32xf32>
    %10 = math.tanh %9 : vector<8x32xf32>
    %cst_9 = arith.constant dense<0.000000e+00> : vector<8x16xf32>
    %11 = tpu.matmul %10, %2, %cst_9 {dimension_numbers = #tpu.dot_dimension_numbers<[1], [0], [0], [1], [0, 0, 1, 1], [], []>} : vector<8x32xf32>, vector<32x16xf32>, vector<8x16xf32> -> vector<8x16xf32>
    %12 = vector.broadcast %5 : vector<1x16xf32> to vector<8x16xf32>
    %13 = arith.addf %11, %12 : vector<8x16xf32>
    %14 = math.tanh %13 : vector<8x16xf32>
    %cst_10 = arith.constant dense<0.000000e+00> : vector<8x4xf32>
    %15 = tpu.matmul %14, %3, %cst_10 {dimension_numbers = #tpu.dot_dimension_numbers<[1], [0], [0], [1], [0, 0, 1, 1], [], []>} : vector<8x16xf32>, vector<16x4xf32>, vector<8x4xf32> -> vector<8x4xf32>
    %16 = vector.broadcast %6 : vector<1x4xf32> to vector<8x4xf32>
    %17 = arith.addf %15, %16 : vector<8x4xf32>
    %18 = math.tanh %17 : vector<8x4xf32>
    %cst_11 = arith.constant 2.000000e+00 : f32
    %19 = vector.broadcast %cst_11 : f32 to vector<8x4xf32>
    %20 = arith.mulf %18, %19 : vector<8x4xf32>
    %c0_12 = arith.constant 0 : index
    %c0_13 = arith.constant 0 : index
    %21 = vector.load %arg4[%c0_12, %c0_13] : memref<8x4xf32, #tpu.memory_space<vmem>>, vector<8x4xf32>
    tpu.vector_store %arg4[%c0_12, %c0_13], %20 {strides = array<i32>} : memref<8x4xf32, #tpu.memory_space<vmem>>, vector<8x4xf32>,
    return
  }
  func.func @transform_0(%arg0: i32) -> (i32, i32) {
    %c0_i32 = arith.constant 0 : i32
    %c0_i32_0 = arith.constant 0 : i32
    return %arg0, %c0_i32 : i32, i32
  }
  func.func @transform_1(%arg0: i32) -> (i32, i32) {
    %c0_i32 = arith.constant 0 : i32
    %c0_i32_0 = arith.constant 0 : i32
    %c0_i32_1 = arith.constant 0 : i32
    return %c0_i32, %c0_i32_0 : i32, i32
  }
  func.func @transform_2(%arg0: i32) -> (i32, i32) {
    %c0_i32 = arith.constant 0 : i32
    %c0_i32_0 = arith.constant 0 : i32
    %c0_i32_1 = arith.constant 0 : i32
    return %c0_i32, %c0_i32_0 : i32, i32
  }
  func.func @transform_3(%arg0: i32) -> (i32, i32) {
    %c0_i32 = arith.constant 0 : i32
    %c0_i32_0 = arith.constant 0 : i32
    return %arg0, %c0_i32 : i32, i32
  }
}

</mosaic_0001>

<llo_original>
// kernel: tpu_custom_call.1
$region0: #{tpu_custom_call.1}
  #allocation0 [shape = 'u32[]', space=smem, size = 0x4, offset = 0x4, fixed_abs, tag = 'smem constant byte address 0x4 - core index']
  #allocation1 [shape = 'u32[144,128]{1,0:T(1,128)}', space=vmem, size = 0x12000, scoped, tag = 'internal scratch']
  %s0 = inlined_call_operand.hbm [shape: f32[8,16], index: 0, kind: input, shape index: {}]
  %s1 = inlined_call_operand.hbm [shape: f32[64,128], index: 1, kind: input, shape index: {}]
  %s2 = inlined_call_operand.hbm [shape: f32[8,128], index: 2, kind: input, shape index: {}]
  %s3 = inlined_call_operand.vmem [shape: f32[8,4], index: 3, kind: output, shape index: {}]
  %s4 = sld [smem:[#allocation0]]
  $region34: #{tpu_custom_call.1} parent=0
    _
  %s6 = ssub.s32 1, %s4
  %s7 = scalar_select 0, %s6, %s4
  $region1: #{tpu_custom_call.1} parent=0
    #allocation2 [shape = 'u8[4096]{0}', space=vmem, size = 0x1000, scoped, tag = 'input window, operand 0, single buffered']
    #allocation3 [shape = 's32[1]{0}', space=sflag, size = 0x4, scoped, tag = 'scoped memory for tpu_custom_call.1']
    #allocation4 [shape = 'u8[32768]{0}', space=vmem, size = 0x8000, scoped, tag = 'input window, operand 1, single buffered']
    #allocation5 [shape = 's32[1]{0}', space=sflag, size = 0x4, scoped, tag = 'scoped memory for tpu_custom_call.1']
    #allocation6 [shape = 'u8[4096]{0}', space=vmem, size = 0x1000, scoped, tag = 'input window, operand 2, single buffered']
    %8 = vsyncpa [#allocation3], 0
    %9 = vsyncpa [#allocation5], 0
    // Predicated region
    $region2: #{tpu_custom_call.1} parent=1 // pred_check
      _
    $region3: #{tpu_custom_call.1} parent=1 // pred_check_branch
      %11 = sbr.rel (0) target = $region5
    $region4: #{tpu_custom_call.1} parent=1 // pred_region
      %s13 = ssub.s32 128, 128
      %14 = vsyncadd [#allocation3], %s13
      %s16 = sshll.u32 [#allocation2], 4
      %s17 = int_to_ptr.vmem [resolvable:$true] %s16
      %19 = dma.hbm_to_vmem [thread:$0]  %s0, 128, %s17, [#allocation3]
    $region5: #{tpu_custom_call.1} parent=1 // pred_fallthru
      _
    // Predicated region
    $region6: #{tpu_custom_call.1} parent=1 // pred_check
      _
    $region7: #{tpu_custom_call.1} parent=1 // pred_check_branch
      %21 = sbr.rel (0) target = $region9
    $region8: #{tpu_custom_call.1} parent=1 // pred_region
      %s23 = ssub.s32 1024, 1024
      %24 = vsyncadd [#allocation5], %s23
      %s25 = sshll.u32 [#allocation4], 4
      %s26 = int_to_ptr.vmem [resolvable:$true] %s25
      %31 = dma.hbm_to_vmem [thread:$0]  %s1, 1024, %s26, [#allocation5], 128, 128, 8
    $region9: #{tpu_custom_call.1} parent=1 // pred_fallthru
      _
    // Predicated region
    $region10: #{tpu_custom_call.1} parent=1 // pred_check
      _
    $region11: #{tpu_custom_call.1} parent=1 // pred_check_branch
      %33 = sbr.rel (0) target = $region13
    $region12: #{tpu_custom_call.1} parent=1 // pred_region
      %s35 = ssub.s32 128, 128
      %36 = vsyncadd [#allocation5], %s35
      %s38 = sshll.u32 [#allocation6], 4
      %s39 = int_to_ptr.vmem [resolvable:$true] %s38
      %41 = dma.hbm_to_vmem [thread:$0]  %s2, 128, %s39, [#allocation5]
    $region13: #{tpu_custom_call.1} parent=1 // pred_fallthru
      _
    // Predicated region
    $region14: #{tpu_custom_call.1} parent=1 // pred_check
      _
    $region15: #{tpu_custom_call.1} parent=1 // pred_check_branch
      %43 = sbr.rel (0) target = $region17
    $region16: #{tpu_custom_call.1} parent=1 // pred_region
      %44 = dma.done [#allocation3], 128
    $region17: #{tpu_custom_call.1} parent=1 // pred_fallthru
      _
    // Predicated region
    $region18: #{tpu_custom_call.1} parent=1 // pred_check
      _
    $region19: #{tpu_custom_call.1} parent=1 // pred_check_branch
      %46 = sbr.rel (0) target = $region21
    $region20: #{tpu_custom_call.1} parent=1 // pred_region
      %47 = dma.done [#allocation5], 1024
    $region21: #{tpu_custom_call.1} parent=1 // pred_fallthru
      _
    // Predicated region
    $region22: #{tpu_custom_call.1} parent=1 // pred_check
      _
    $region23: #{tpu_custom_call.1} parent=1 // pred_check_branch
      %49 = sbr.rel (0) target = $region25
    $region24: #{tpu_custom_call.1} parent=1 // pred_region
      %50 = dma.done [#allocation5], 128
    $region25: #{tpu_custom_call.1} parent=1 // pred_fallthru
      _
    %v51 = vld [vmem:[#allocation2] sm:$0xff]
    %v52 = vld [vmem:[#allocation4] sm:$0xff]
    %v53 = vld [vmem:[#allocation4 + $0x8] sm:$0xff]
    %v54 = vld [vmem:[#allocation4 + $0x10] sm:$0xff]
    %v55 = vld [vmem:[#allocation4 + $0x18] sm:$0xff]
    %v56 = vld [vmem:[#allocation4 + $0x20] sm:$0xff]
    %v57 = vld [vmem:[#allocation4 + $0x28] sm:$0xff]
    %v58 = vld [vmem:[#allocation4 + $0x30] sm:$0xff]
    %v59 = vld [vmem:[#allocation4 + $0x38] sm:$0xff]
    %v60 = vld [vmem:[#allocation6] sm:$0x1]
    %v61 = vld [vmem:[#allocation6 + $0x1] sm:$0x1]
    %v62 = vld [vmem:[#allocation6 + $0x2] sm:$0x1]
    %v63 = vlaneseq
    %v64 = vshrl.u32 %v63, 7
    %v65 = vsub.s32 0, %v64
    %v66 = vrot.slane %v60, %v65
    %vm67 = vcmask 130048
    %v69 = vsel %vm67, %v51, 0
    %71 = vmatprep.subr.mxu0 0.0
    %72 = vmatpush1.msra.mxu0 %v52
    %73 = vmatprep.subr.mxu0 0.0
    %74 = vmatpush1.msra.mxu0 %v53
    %75 = vmatprep.subr.mxu0 0.0
    %76 = vmatpush1.msra.mxu0 0.0
    %77 = vmatprep.subr.mxu0 0.0
    %78 = vmatpush1.msra.mxu0 0.0
    %79 = vmatprep.subr.mxu0 0.0
    %80 = vmatpush1.msra.mxu0 0.0
    %81 = vmatprep.subr.mxu0 0.0
    %82 = vmatpush1.msra.mxu0 0.0
    %83 = vmatprep.subr.mxu0 0.0
    %84 = vmatpush1.msra.mxu0 0.0
    %85 = vmatprep.subr.mxu0 0.0
    %86 = vmatpush1.msra.mxu0 0.0
    %87 = vmatprep.subr.mxu0 0.0
    %88 = vmatpush1.msra.mxu0 0.0
    %89 = vmatprep.subr.mxu0 0.0
    %90 = vmatpush1.msra.mxu0 0.0
    %91 = vmatprep.subr.mxu0 0.0
    %92 = vmatpush1.msra.mxu0 0.0
    %93 = vmatprep.subr.mxu0 0.0
    %94 = vmatpush1.msra.mxu0 0.0
    %95 = vmatprep.subr.mxu0 0.0
    %96 = vmatpush1.msra.mxu0 0.0
    %97 = vmatprep.subr.mxu0 0.0
    %98 = vmatpush1.msra.mxu0 0.0
    %99 = vmatprep.subr.mxu0 0.0
    %100 = vmatpush1.msra.mxu0 0.0
    %101 = vmatprep.subr.mxu0 0.0
    %102 = vmatpush1.msra.mxu0 0.0
    %103 = vmatprep.subr.mxu0 0.0
    %104 = vmatpush1.msra.mxu0 0.0
    %105 = vmatprep.subr.mxu0 0.0
    %106 = vmatpush1.msra.mxu0 0.0
    %107 = vmatprep.subr.mxu0 0.0
    %108 = vmatpush1.msra.mxu0 0.0
    %109 = vmatprep.subr.mxu0 0.0
    %110 = vmatpush1.msra.mxu0 0.0
    %111 = vmatprep.subr.mxu0 0.0
    %112 = vmatpush1.msra.mxu0 0.0
    %113 = vmatprep.subr.mxu0 0.0
    %114 = vmatpush1.msra.mxu0 0.0
    %115 = vmatprep.subr.mxu0 0.0
    %116 = vmatpush1.msra.mxu0 0.0
    %117 = vmatprep.subr.mxu0 0.0
    %118 = vmatpush1.msra.mxu0 0.0
    %119 = vmatprep.subr.mxu0 0.0
    %120 = vmatpush1.msra.mxu0 0.0
    %121 = vmatprep.subr.mxu0 0.0
    %122 = vmatpush1.msra.mxu0 0.0
    %123 = vmatprep.subr.mxu0 0.0
    %124 = vmatpush1.msra.mxu0 0.0
    %125 = vmatprep.subr.mxu0 0.0
    %126 = vmatpush1.msra.mxu0 0.0
    %127 = vmatprep.subr.mxu0 0.0
    %128 = vmatpush1.msra.mxu0 0.0
    %129 = vmatprep.subr.mxu0 0.0
    %130 = vmatpush1.msra.mxu0 0.0
    %131 = vmatprep.subr.mxu0 0.0
    %132 = vmatpush1.msra.mxu0 0.0
    %133 = vmatprep.subr.mxu0 0.0
    %134 = vmatpush1.msra.mxu0 0.0
    %135 = vmatprep.mubr.f32.mxu0 0.0
    %136 = vmatmul.mubr.f32.gmra.mrb[0].mxu0 %v69
    %v137 = vpop.f32.mrb[0].mxu0
    %v138 = vadd.f32 %v66, %v137
    %v139 = vpop.f32.mrb[0].mxu0
    %140 = vdwg.mxu0
    %v141 = vtanh.pop %v138
    %v142 = vlaneseq
    %v143 = vshrl.u32 %v142, 7
    %v144 = vsub.s32 0, %v143
    %v145 = vrot.slane %v61, %v144
    %vm146 = vcmask 261120
    %v148 = vsel %vm146, %v141, 0
    %150 = vmatprep.subr.mxu0 0.0
    %151 = vmatpush1.msra.mxu0 %v54
    %152 = vmatprep.subr.mxu0 0.0
    %153 = vmatpush1.msra.mxu0 %v55
    %154 = vmatprep.subr.mxu0 0.0
    %155 = vmatpush1.msra.mxu0 %v56
    %156 = vmatprep.subr.mxu0 0.0
    %157 = vmatpush1.msra.mxu0 %v57
    %158 = vmatprep.subr.mxu0 0.0
    %159 = vmatpush1.msra.mxu0 0.0
    %160 = vmatprep.subr.mxu0 0.0
    %161 = vmatpush1.msra.mxu0 0.0
    %162 = vmatprep.subr.mxu0 0.0
    %163 = vmatpush1.msra.mxu0 0.0
    %164 = vmatprep.subr.mxu0 0.0
    %165 = vmatpush1.msra.mxu0 0.0
    %166 = vmatprep.subr.mxu0 0.0
    %167 = vmatpush1.msra.mxu0 0.0
    %168 = vmatprep.subr.mxu0 0.0
    %169 = vmatpush1.msra.mxu0 0.0
    %170 = vmatprep.subr.mxu0 0.0
    %171 = vmatpush1.msra.mxu0 0.0
    %172 = vmatprep.subr.mxu0 0.0
    %173 = vmatpush1.msra.mxu0 0.0
    %174 = vmatprep.subr.mxu0 0.0
    %175 = vmatpush1.msra.mxu0 0.0
    %176 = vmatprep.subr.mxu0 0.0
    %177 = vmatpush1.msra.mxu0 0.0
    %178 = vmatprep.subr.mxu0 0.0
    %179 = vmatpush1.msra.mxu0 0.0
    %180 = vmatprep.subr.mxu0 0.0
    %181 = vmatpush1.msra.mxu0 0.0
    %182 = vmatprep.subr.mxu0 0.0
    %183 = vmatpush1.msra.mxu0 0.0
    %184 = vmatprep.subr.mxu0 0.0
    %185 = vmatpush1.msra.mxu0 0.0
    %186 = vmatprep.subr.mxu0 0.0
    %187 = vmatpush1.msra.mxu0 0.0
    %188 = vmatprep.subr.mxu0 0.0
    %189 = vmatpush1.msra.mxu0 0.0
    %190 = vmatprep.subr.mxu0 0.0
    %191 = vmatpush1.msra.mxu0 0.0
    %192 = vmatprep.subr.mxu0 0.0
    %193 = vmatpush1.msra.mxu0 0.0
    %194 = vmatprep.subr.mxu0 0.0
    %195 = vmatpush1.msra.mxu0 0.0
    %196 = vmatprep.subr.mxu0 0.0
    %197 = vmatpush1.msra.mxu0 0.0
    %198 = vmatprep.subr.mxu0 0.0
    %199 = vmatpush1.msra.mxu0 0.0
    %200 = vmatprep.subr.mxu0 0.0
    %201 = vmatpush1.msra.mxu0 0.0
    %202 = vmatprep.subr.mxu0 0.0
    %203 = vmatpush1.msra.mxu0 0.0
    %204 = vmatprep.subr.mxu0 0.0
    %205 = vmatpush1.msra.mxu0 0.0
    %206 = vmatprep.subr.mxu0 0.0
    %207 = vmatpush1.msra.mxu0 0.0
    %208 = vmatprep.subr.mxu0 0.0
    %209 = vmatpush1.msra.mxu0 0.0
    %210 = vmatprep.subr.mxu0 0.0
    %211 = vmatpush1.msra.mxu0 0.0
    %212 = vmatprep.subr.mxu0 0.0
    %213 = vmatpush1.msra.mxu0 0.0
    %214 = vmatprep.mubr.f32.mxu0 0.0
    %215 = vmatmul.mubr.f32.gmra.mrb[0].mxu0 %v148
    %v216 = vpop.f32.mrb[0].mxu0
    %v217 = vadd.f32 %v145, %v216
    %v218 = vpop.f32.mrb[0].mxu0
    %219 = vdwg.mxu0
    %v220 = vtanh.pop %v217
    %v221 = vlaneseq
    %v222 = vshrl.u32 %v221, 7
    %v223 = vsub.s32 0, %v222
    %v224 = vrot.slane %v62, %v223
    %v226 = vsel %vm67, %v220, 0
    %228 = vmatprep.subr.mxu0 0.0
    %229 = vmatpush1.msra.mxu0 %v58
    %230 = vmatprep.subr.mxu0 0.0
    %231 = vmatpush1.msra.mxu0 %v59
    %232 = vmatprep.subr.mxu0 0.0
    %233 = vmatpush1.msra.mxu0 0.0
    %234 = vmatprep.subr.mxu0 0.0
    %235 = vmatpush1.msra.mxu0 0.0
    %236 = vmatprep.subr.mxu0 0.0
    %237 = vmatpush1.msra.mxu0 0.0
    %238 = vmatprep.subr.mxu0 0.0
    %239 = vmatpush1.msra.mxu0 0.0
    %240 = vmatprep.subr.mxu0 0.0
    %241 = vmatpush1.msra.mxu0 0.0
    %242 = vmatprep.subr.mxu0 0.0
    %243 = vmatpush1.msra.mxu0 0.0
    %244 = vmatprep.subr.mxu0 0.0
    %245 = vmatpush1.msra.mxu0 0.0
    %246 = vmatprep.subr.mxu0 0.0
    %247 = vmatpush1.msra.mxu0 0.0
    %248 = vmatprep.subr.mxu0 0.0
    %249 = vmatpush1.msra.mxu0 0.0
    %250 = vmatprep.subr.mxu0 0.0
    %251 = vmatpush1.msra.mxu0 0.0
    %252 = vmatprep.subr.mxu0 0.0
    %253 = vmatpush1.msra.mxu0 0.0
    %254 = vmatprep.subr.mxu0 0.0
    %255 = vmatpush1.msra.mxu0 0.0
    %256 = vmatprep.subr.mxu0 0.0
    %257 = vmatpush1.msra.mxu0 0.0
    %258 = vmatprep.subr.mxu0 0.0
    %259 = vmatpush1.msra.mxu0 0.0
    %260 = vmatprep.subr.mxu0 0.0
    %261 = vmatpush1.msra.mxu0 0.0
    %262 = vmatprep.subr.mxu0 0.0
    %263 = vmatpush1.msra.mxu0 0.0
    %264 = vmatprep.subr.mxu0 0.0
    %265 = vmatpush1.msra.mxu0 0.0
    %266 = vmatprep.subr.mxu0 0.0
    %267 = vmatpush1.msra.mxu0 0.0
    %268 = vmatprep.subr.mxu0 0.0
    %269 = vmatpush1.msra.mxu0 0.0
    %270 = vmatprep.subr.mxu0 0.0
    %271 = vmatpush1.msra.mxu0 0.0
    %272 = vmatprep.subr.mxu0 0.0
    %273 = vmatpush1.msra.mxu0 0.0
    %274 = vmatprep.subr.mxu0 0.0
    %275 = vmatpush1.msra.mxu0 0.0
    %276 = vmatprep.subr.mxu0 0.0
    %277 = vmatpush1.msra.mxu0 0.0
    %278 = vmatprep.subr.mxu0 0.0
    %279 = vmatpush1.msra.mxu0 0.0
    %280 = vmatprep.subr.mxu0 0.0
    %281 = vmatpush1.msra.mxu0 0.0
    %282 = vmatprep.subr.mxu0 0.0
    %283 = vmatpush1.msra.mxu0 0.0
    %284 = vmatprep.subr.mxu0 0.0
    %285 = vmatpush1.msra.mxu0 0.0
    %286 = vmatprep.subr.mxu0 0.0
    %287 = vmatpush1.msra.mxu0 0.0
    %288 = vmatprep.subr.mxu0 0.0
    %289 = vmatpush1.msra.mxu0 0.0
    %290 = vmatprep.subr.mxu0 0.0
    %291 = vmatpush1.msra.mxu0 0.0
    %292 = vmatprep.mubr.f32.mxu0 0.0
    %293 = vmatmul.mubr.f32.gmra.mrb[0].mxu0 %v226
    %v294 = vpop.f32.mrb[0].mxu0
    %v295 = vadd.f32 %v224, %v294
    %v296 = vpop.f32.mrb[0].mxu0
    %297 = vdwg.mxu0
    %v298 = vtanh.pop %v295
    %v299 = vmul.f32 %v298, 2.0
    %vm300 = vcmask 31744
    %301 = vst.msk [vmem:[%s3] sm:$0xff] %vm300, %v299
    // Predicated region
    $region26: #{tpu_custom_call.1} parent=1 // pred_check
      _
    $region27: #{tpu_custom_call.1} parent=1 // pred_check_branch
      %303 = sbr.rel (0) target = $region29
    $region28: #{tpu_custom_call.1} parent=1 // pred_region
      _
    $region29: #{tpu_custom_call.1} parent=1 // pred_fallthru
      _
    // Predicated region
    $region30: #{tpu_custom_call.1} parent=1 // pred_check
      _
    $region31: #{tpu_custom_call.1} parent=1 // pred_check_branch
      %305 = sbr.rel (0) target = $region33
    $region32: #{tpu_custom_call.1} parent=1 // pred_region
      _
    $region33: #{tpu_custom_call.1} parent=1 // pred_fallthru
      _
    %306 = vsyncpa [#allocation3], 1
    %307 = vsyncpa [#allocation5], 1

</llo_original>
